<compile_context>
chip_gen: v6e
topology: v6e:2x2x1
jax: 0.10.0
libtpu: 0.0.40
codegen_flags: <defaults>
</compile_context>

<pallas_src>
import jax
import jax.numpy as jnp
from jax import lax
from jax.experimental import pallas as pl
from jax.experimental.pallas import tpu as pltpu


def _round_up(n, m):
    return ((n + m - 1) // m) * m


def _mlp_kernel(x_ref, w1_ref, b1_ref, w2_ref, b2_ref, w4_ref, b4_ref, o_ref):
    # x tile: [bt, D] f32 straight from HBM; cast to bf16 in-kernel (VPU, hidden
    # under the x DMA) — avoids a separate wrapper-side cast pass over HBM.
    x_bf = x_ref[...].astype(jnp.bfloat16)                                 # [bt, D]

    # fc1 + ReLU   (dropout1 == identity in eval mode)
    # rhs-transposed MXU matmul: contract w1's D with x's D -> [16, bt] (lane-dense),
    # no explicit transpose materialized in the kernel source.
    h1 = lax.dot_general(
        w1_ref[...], x_bf,
        dimension_numbers=(((1,), (1,)), ((), ())),
        preferred_element_type=jnp.float32,
    )                                                                      # [16, bt] f32
    h1 = jnp.maximum(h1 + b1_ref[...], 0.0)

    # fc2 + ReLU   (dropout2, dropout3 == identity in eval mode)
    h2 = jnp.dot(w2_ref[...], h1.astype(w2_ref.dtype),
                 preferred_element_type=jnp.float32)                       # [8, bt] f32
    h2 = jnp.maximum(h2 + b2_ref[...], 0.0)

    # fc4 + sigmoid
    z = jnp.dot(w4_ref[...], h2.astype(w4_ref.dtype),
                preferred_element_type=jnp.float32) + b4_ref[...]          # [1, bt] f32
    o_ref[...] = jax.nn.sigmoid(z).astype(o_ref.dtype)


def _pick_batch_tile(B, D, batch_tile):
    """Largest lane-aligned batch tile that (a) fits a conservative VMEM budget,
    (b) leaves >= 2 grid steps (v7x megacore sharding), (c) <= user cap."""
    lane_d = _round_up(D, 128)
    # per-row VMEM bytes: double-buffered f32 x block (lane-padded) + in-kernel
    # bf16 copy / transposed MXU operand + f32 h1/h2 + output block slack.
    per_row = 2 * lane_d * 4 + 2 * lane_d * 2 + 16 * 4 + 8 * 4 + 64
    vmem_budget = 24 * 1024 * 1024          # conservative vs 48 MiB scoped limit
    bt_vmem = max(128, (vmem_budget // per_row) // 128 * 128)
    bt_split = _round_up(pl.cdiv(B, 2), 128)   # guarantee >= 2 grid steps
    return max(128, min(batch_tile, bt_vmem, bt_split))


def simple_nn_forward(x, params, *, batch_tile=32768):
    """x: [B, input_dim] float32. params: w* as [out, in], b* as [out, 1] (f32)."""
    B, D = x.shape
    assert batch_tile % 128 == 0, "batch tile must be a multiple of 128 (lane axis)"

    bt = _pick_batch_tile(B, D, batch_tile)
    num_tiles = pl.cdiv(B, bt)   # ragged grid: partial tail block is masked on write

    # Tiny weights in bf16 (MXU-native); biases f32. x is NOT touched here.
    w1 = params["w1"].astype(jnp.bfloat16)   # [16, D]
    w2 = params["w2"].astype(jnp.bfloat16)   # [8, 16]
    w4 = params["w4"].astype(jnp.bfloat16)   # [1, 8]
    b1 = params["b1"].astype(jnp.float32)    # [16, 1]
    b2 = params["b2"].astype(jnp.float32)    # [8, 1]
    b4 = params["b4"].astype(jnp.float32)    # [1, 1]

    # Weights/biases: constant-index full blocks, VMEM-resident across the grid.
    def full(a):
        return pl.BlockSpec(a.shape, lambda i: (0,) * a.ndim)

    flops = 2 * B * (D * 16 + 16 * 8 + 8 * 1)
    bytes_accessed = (B * D * 4 + B * 4
                      + (D * 16 + 16 * 8 + 8) * 2 + (16 + 8 + 1) * 4)

    out = pl.pallas_call(
        _mlp_kernel,
        out_shape=jax.ShapeDtypeStruct((1, B), jnp.float32),
        grid_spec=pltpu.PrefetchScalarGridSpec(
            num_scalar_prefetch=0,
            grid=(num_tiles,),
            in_specs=[
                pl.BlockSpec((bt, D), lambda i: (i, 0)),   # x streamed over batch
                full(w1), full(b1),
                full(w2), full(b2),
                full(w4), full(b4),
            ],
            # Lane-dense output: block (1, bt), batch on the lane axis.
            out_specs=pl.BlockSpec((1, bt), lambda i: (0, i)),
        ),
        compiler_params=pltpu.CompilerParams(
            dimension_semantics=("parallel",),
            vmem_limit_bytes=48 * 1024 * 1024,   # explicit, with headroom on v7x/v5e
        ),
        cost_estimate=pl.CostEstimate(
            flops=flops,
            transcendentals=B,            # sigmoid
            bytes_accessed=bytes_accessed,
        ),
    )(x, w1, b1, w2, b2, w4, b4)

    # [1, B] -> [B, 1]
    return out.reshape(B, 1)


def init_params(key, input_dim):
    """Deterministic init mimicking nn.Linear (weights [out, in], biases [out, 1])."""
    k1, k2, k3, k4, k5, k6 = jax.random.split(key, 6)

    def linear_init(kw, kb, fan_in, fan_out):
        bound = 1.0 / jnp.sqrt(fan_in)
        w = jax.random.uniform(kw, (fan_out, fan_in), jnp.float32, -bound, bound)
        b = jax.random.uniform(kb, (fan_out, 1), jnp.float32, -bound, bound)
        return w, b

    w1, b1 = linear_init(k1, k2, input_dim, 16)
    w2, b2 = linear_init(k3, k4, 16, 8)
    w4, b4 = linear_init(k5, k6, 8, 1)
    return {"w1": w1, "b1": b1, "w2": w2, "b2": b2, "w4": w4, "b4": b4}


def _reference(x, p):
    # f32 reference with PyTorch-style [out, in] weights.
    h1 = jnp.maximum(x @ p["w1"].T + p["b1"].T, 0.0)
    h2 = jnp.maximum(h1 @ p["w2"].T + p["b2"].T, 0.0)
    return jax.nn.sigmoid(h2 @ p["w4"].T + p["b4"].T)


if __name__ == "__main__":
    key = jax.random.PRNGKey(0)
    kx, kp = jax.random.split(key)

    # Small demo: batch=200 exercises the ragged (cdiv) tail (200 = 128 + 72)
    # and a 2-step, pipelined, 2-TC-shardable grid.
    batch, input_dim = 200, 32
    x = jax.random.normal(kx, (batch, input_dim), jnp.float32)
    params = init_params(kp, input_dim)

    out = simple_nn_forward(x, params)
    out = jax.block_until_ready(out)

    ref = _reference(x, params)
    assert out.shape == (batch, 1)
    # bf16 weights + in-kernel bf16 cast of x -> slightly looser tolerance vs f32 ref.
    assert jnp.allclose(out, ref, atol=2e-2, rtol=2e-2), "mismatch vs reference"

    print("KERNEL_OK")
</pallas_src>

<mosaic_0001>
module attributes {stable_mosaic.version = 11 : i64} {
  func.func @_mlp_kernel(%arg0: i32, %arg1: memref<128x32xf32, #tpu.memory_space<vmem>>, %arg2: memref<16x32xbf16, #tpu.memory_space<vmem>>, %arg3: memref<16x1xf32, #tpu.memory_space<vmem>>, %arg4: memref<8x16xbf16, #tpu.memory_space<vmem>>, %arg5: memref<8x1xf32, #tpu.memory_space<vmem>>, %arg6: memref<1x8xbf16, #tpu.memory_space<vmem>>, %arg7: memref<1x1xf32, #tpu.memory_space<vmem>>, %arg8: memref<1x128xf32, #tpu.memory_space<vmem>>) attributes {dimension_semantics = [#tpu.dimension_semantics<parallel>], iteration_bounds = array<i64: 2>, scalar_prefetch = 0 : i64, scratch_operands = 0 : i64, tpu.core_type = #tpu.core_type<tc>, window_params = [{transform_indices = @transform_0, window_bounds = array<i64: 128, 32>}, {pipeline_mode = #tpu.pipeline_mode<synchronous>, transform_indices = @transform_1, window_bounds = array<i64: 16, 32>}, {pipeline_mode = #tpu.pipeline_mode<synchronous>, transform_indices = @transform_2, window_bounds = array<i64: 16, 1>}, {pipeline_mode = #tpu.pipeline_mode<synchronous>, transform_indices = @transform_3, window_bounds = array<i64: 8, 16>}, {pipeline_mode = #tpu.pipeline_mode<synchronous>, transform_indices = @transform_4, window_bounds = array<i64: 8, 1>}, {pipeline_mode = #tpu.pipeline_mode<synchronous>, transform_indices = @transform_5, window_bounds = array<i64: 1, 8>}, {pipeline_mode = #tpu.pipeline_mode<synchronous>, transform_indices = @transform_6, window_bounds = array<i64: 1, 1>}, {transform_indices = @transform_7, window_bounds = array<i64: 1, 128>}]} {
    %c0 = arith.constant 0 : index
    %c0_0 = arith.constant 0 : index
    %0 = vector.load %arg1[%c0, %c0_0] : memref<128x32xf32, #tpu.memory_space<vmem>>, vector<128x32xf32>
    %1 = arith.truncf %0 : vector<128x32xf32> to vector<128x32xbf16>
    %c0_1 = arith.constant 0 : index
    %c0_2 = arith.constant 0 : index
    %2 = vector.load %arg2[%c0_1, %c0_2] : memref<16x32xbf16, #tpu.memory_space<vmem>>, vector<16x32xbf16>
    %cst = arith.constant dense<0.000000e+00> : vector<16x128xf32>
    %3 = tpu.matmul %2, %1, %cst {dimension_numbers = #tpu.dot_dimension_numbers<[1], [1], [0], [0], [0, 0, 1, 0], [], []>} : vector<16x32xbf16>, vector<128x32xbf16>, vector<16x128xf32> -> vector<16x128xf32>
    %c0_3 = arith.constant 0 : index
    %c0_4 = arith.constant 0 : index
    %4 = vector.load %arg3[%c0_3, %c0_4] : memref<16x1xf32, #tpu.memory_space<vmem>>, vector<16x1xf32>
    %5 = vector.broadcast %4 : vector<16x1xf32> to vector<16x128xf32>
    %6 = arith.addf %3, %5 : vector<16x128xf32>
    %cst_5 = arith.constant 0.000000e+00 : f32
    %7 = vector.broadcast %cst_5 : f32 to vector<16x128xf32>
    %8 = arith.maximumf %6, %7 : vector<16x128xf32>
    %c0_6 = arith.constant 0 : index
    %c0_7 = arith.constant 0 : index
    %9 = vector.load %arg4[%c0_6, %c0_7] : memref<8x16xbf16, #tpu.memory_space<vmem>>, vector<8x16xbf16>
    %10 = arith.truncf %8 : vector<16x128xf32> to vector<16x128xbf16>
    %cst_8 = arith.constant dense<0.000000e+00> : vector<8x128xf32>
    %11 = tpu.matmul %9, %10, %cst_8 {dimension_numbers = #tpu.dot_dimension_numbers<[1], [0], [0], [1], [0, 0, 1, 1], [], []>} : vector<8x16xbf16>, vector<16x128xbf16>, vector<8x128xf32> -> vector<8x128xf32>
    %c0_9 = arith.constant 0 : index
    %c0_10 = arith.constant 0 : index
    %12 = vector.load %arg5[%c0_9, %c0_10] : memref<8x1xf32, #tpu.memory_space<vmem>>, vector<8x1xf32>
    %13 = vector.broadcast %12 : vector<8x1xf32> to vector<8x128xf32>
    %14 = arith.addf %11, %13 : vector<8x128xf32>
    %cst_11 = arith.constant 0.000000e+00 : f32
    %15 = vector.broadcast %cst_11 : f32 to vector<8x128xf32>
    %16 = arith.maximumf %14, %15 : vector<8x128xf32>
    %c0_12 = arith.constant 0 : index
    %c0_13 = arith.constant 0 : index
    %17 = vector.load %arg6[%c0_12, %c0_13] : memref<1x8xbf16, #tpu.memory_space<vmem>>, vector<1x8xbf16>
    %18 = arith.truncf %16 : vector<8x128xf32> to vector<8x128xbf16>
    %cst_14 = arith.constant dense<0.000000e+00> : vector<1x128xf32>
    %19 = tpu.matmul %17, %18, %cst_14 {dimension_numbers = #tpu.dot_dimension_numbers<[1], [0], [0], [1], [0, 0, 1, 1], [], []>} : vector<1x8xbf16>, vector<8x128xbf16>, vector<1x128xf32> -> vector<1x128xf32>
    %c0_15 = arith.constant 0 : index
    %c0_16 = arith.constant 0 : index
    %20 = vector.load %arg7[%c0_15, %c0_16] : memref<1x1xf32, #tpu.memory_space<vmem>>, vector<1x1xf32>
    %21 = vector.broadcast %20 : vector<1x1xf32> to vector<1x128xf32>
    %22 = arith.addf %19, %21 : vector<1x128xf32>
    %23 = arith.negf %22 : vector<1x128xf32>
    %24 = math.exp %23 : vector<1x128xf32>
    %cst_17 = arith.constant 1.000000e+00 : f32
    %25 = vector.broadcast %cst_17 : f32 to vector<1x128xf32>
    %26 = arith.addf %25, %24 : vector<1x128xf32>
    %27 = arith.divf %25, %26 : vector<1x128xf32>
    %c0_18 = arith.constant 0 : index
    %c0_19 = arith.constant 0 : index
    %28 = vector.load %arg8[%c0_18, %c0_19] : memref<1x128xf32, #tpu.memory_space<vmem>>, vector<1x128xf32>
    tpu.vector_store %arg8[%c0_18, %c0_19], %27 {strides = array<i32>} : memref<1x128xf32, #tpu.memory_space<vmem>>, vector<1x128xf32>,
    return
  }
  func.func @transform_0(%arg0: i32) -> (i32, i32) {
    %c0_i32 = arith.constant 0 : i32
    %c0_i32_0 = arith.constant 0 : i32
    return %arg0, %c0_i32 : i32, i32
  }
  func.func @transform_1(%arg0: i32) -> (i32, i32) {
    %c0_i32 = arith.constant 0 : i32
    %c0_i32_0 = arith.constant 0 : i32
    %c0_i32_1 = arith.constant 0 : i32
    return %c0_i32, %c0_i32_0 : i32, i32
  }
  func.func @transform_2(%arg0: i32) -> (i32, i32) {
    %c0_i32 = arith.constant 0 : i32
    %c0_i32_0 = arith.constant 0 : i32
    %c0_i32_1 = arith.constant 0 : i32
    return %c0_i32, %c0_i32_0 : i32, i32
  }
  func.func @transform_3(%arg0: i32) -> (i32, i32) {
    %c0_i32 = arith.constant 0 : i32
    %c0_i32_0 = arith.constant 0 : i32
    %c0_i32_1 = arith.constant 0 : i32
    return %c0_i32, %c0_i32_0 : i32, i32
  }
  func.func @transform_4(%arg0: i32) -> (i32, i32) {
    %c0_i32 = arith.constant 0 : i32
    %c0_i32_0 = arith.constant 0 : i32
    %c0_i32_1 = arith.constant 0 : i32
    return %c0_i32, %c0_i32_0 : i32, i32
  }
  func.func @transform_5(%arg0: i32) -> (i32, i32) {
    %c0_i32 = arith.constant 0 : i32
    %c0_i32_0 = arith.constant 0 : i32
    %c0_i32_1 = arith.constant 0 : i32
    return %c0_i32, %c0_i32_0 : i32, i32
  }
  func.func @transform_6(%arg0: i32) -> (i32, i32) {
    %c0_i32 = arith.constant 0 : i32
    %c0_i32_0 = arith.constant 0 : i32
    %c0_i32_1 = arith.constant 0 : i32
    return %c0_i32, %c0_i32_0 : i32, i32
  }
  func.func @transform_7(%arg0: i32) -> (i32, i32) {
    %c0_i32 = arith.constant 0 : i32
    %c0_i32_0 = arith.constant 0 : i32
    return %c0_i32, %arg0 : i32, i32
  }
}

</mosaic_0001>

<llo_original>
// kernel: tpu_custom_call.1
$region0: #{tpu_custom_call.1}
  #allocation0 [shape = 'u32[]', space=smem, size = 0x4, offset = 0x4, fixed_abs, tag = 'smem constant byte address 0x4 - core index']
  #allocation1 [shape = 'u32[144,128]{1,0:T(1,128)}', space=vmem, size = 0x12000, scoped, tag = 'internal scratch']
  #allocation2 [shape = 'f32[1,1]{1,0:T(1,128)S(1)}', space=vmem, size = 0x200, scoped, tag = 'scoped memory for tpu_custom_call.1']
  %s0 = inlined_call_operand.vmem [shape: f32[200,32], index: 0, kind: input, shape index: {}]
  %s1 = inlined_call_operand.vmem [shape: bf16[16,32], index: 1, kind: input, shape index: {}]
  %s2 = inlined_call_operand.vmem [shape: f32[16,1], index: 2, kind: input, shape index: {}]
  %s3 = inlined_call_operand.vmem [shape: bf16[8,16], index: 3, kind: input, shape index: {}]
  %s4 = inlined_call_operand.vmem [shape: f32[8,1], index: 4, kind: input, shape index: {}]
  %s5 = inlined_call_operand.vmem [shape: bf16[1,8], index: 5, kind: input, shape index: {}]
  %s6 = inlined_call_operand.<no memory space> [shape: f32[1,1], index: 6, kind: input, shape index: {}]
  %s7 = inlined_call_operand.hbm [shape: f32[1,200], index: 7, kind: output, shape index: {}]
  %s8 = sld [smem:[#allocation0]]
  $region61: #{tpu_custom_call.1} parent=0
    _
  %s10 = ssub.s32 1, %s8
  %s11 = scalar_select 0, %s10, %s8
  %v12 = vstv %s6
  %13 = vst [vmem:[#allocation2] sm:$0x1] %v12
  $region1: #{tpu_custom_call.1} parent=0
    #allocation3 [shape = 'u8[1024]{0}', space=vmem, size = 0x400, scoped, tag = 'output window, operand 0']
    #allocation4 [shape = 's32[2]{0}', space=sflag, size = 0x8, scoped, tag = 'scoped memory for tpu_custom_call.1']
    %14 = vsyncpa [#allocation4], 0
    %s15 = scalar_lea.sflag [#allocation4], 1
    %16 = vsyncpa %s15, 0
    loop: start=0, step=1, limit=4
    $region2: #{tpu_custom_call.1} parent=1 // loop_pre_header
      _
    $region3: #{tpu_custom_call.1} parent=1 // loop_header
      %s18 = sphi 0, %s22
      %p19 = scmp.ge.s32.totalorder %s18, 4
      %s28 = sphi 0, %s30
      %s31 = sphi 0, %s28
      %s32 = sphi 0, %s31
      %s48 = sphi 0, %s32
      %s52 = sphi 0, %s52
      %s54 = sphi 0, %s52
      %s55 = sphi 0, %s54
      %s69 = sphi 0, %s55
      %s73 = sphi 0, %s73
      %s75 = sphi 0, %s73
      %s76 = sphi 0, %s75
      %s90 = sphi 0, %s76
      %s94 = sphi 0, %s94
      %s96 = sphi 0, %s94
      %s97 = sphi 0, %s96
      %s111 = sphi 0, %s97
      %s115 = sphi 0, %s115
      %s117 = sphi 0, %s115
      %s118 = sphi 0, %s117
      %s132 = sphi 0, %s118
      %s136 = sphi 0, %s136
      %s138 = sphi 0, %s136
      %s139 = sphi 0, %s138
      %s153 = sphi 0, %s139
      %s157 = sphi 0, %s157
      %s159 = sphi 0, %s157
      %s160 = sphi 0, %s159
      %s174 = sphi 0, %s160
      %s180 = sphi 0, %s182
      %s183 = sphi 0, %s180
      %s184 = sphi 0, %s183
      %s200 = sphi 0, %s184
    $region4: #{tpu_custom_call.1} parent=1 // loop_header_branch
      %21 = sbr.rel (%p19) target = $region8
    $region5: #{tpu_custom_call.1} parent=1 // loop_body
      %s23 = ssub.s32 %s18, 1
      %s24 = ssub.s32 %s18, 2
      %s25 = sadd.s32 %s18, 1
      %s26 = ssub.s32 %s18, %s25
      %p27 = scmp.eq.s32.totalorder %s26, 0
      %s29 = sadd.s32 %s28, 1
      %s30 = scalar_select %p27, %s28, %s29
      %p33 = pneg %p27
      %p34 = scmp.eq.s32.totalorder %s18, 1
      %p35 = por %p33, %p34
      %p36 = scmp.ne.s32.totalorder %s28, %s31
      %p37 = scmp.eq.s32.totalorder %s18, 0
      %p38 = por %p36, %p37
      %p39 = scmp.ne.s32.totalorder %s28, %s31
      %p40 = scmp.eq.s32.totalorder %s23, 1
      %p41 = por %p39, %p40
      %p42 = scmp.ne.s32.totalorder %s31, %s32
      %p43 = scmp.eq.s32.totalorder %s23, 0
      %p44 = por %p42, %p43
      %p45 = scmp.ne.s32.totalorder %s31, %s32
      %p46 = scmp.eq.s32.totalorder %s24, 1
      %p47 = por %p45, %p46
      %p49 = scmp.ne.s32.totalorder %s32, %s48
      %p50 = scmp.eq.s32.totalorder %s24, 0
      %p51 = por %p49, %p50
      %s53 = sadd.s32 %s52, 1
      %p56 = scmp.eq.s32.totalorder %s18, 1
      %p57 = scmp.ne.s32.totalorder %s52, %s54
      %p58 = scmp.eq.s32.totalorder %s18, 0
      %p59 = por %p57, %p58
      %p60 = scmp.ne.s32.totalorder %s52, %s54
      %p61 = scmp.eq.s32.totalorder %s23, 1
      %p62 = por %p60, %p61
      %p63 = scmp.ne.s32.totalorder %s54, %s55
      %p64 = scmp.eq.s32.totalorder %s23, 0
      %p65 = por %p63, %p64
      %p66 = scmp.ne.s32.totalorder %s54, %s55
      %p67 = scmp.eq.s32.totalorder %s24, 1
      %p68 = por %p66, %p67
      %p70 = scmp.ne.s32.totalorder %s55, %s69
      %p71 = scmp.eq.s32.totalorder %s24, 0
      %p72 = por %p70, %p71
      %s74 = sadd.s32 %s73, 1
      %p77 = scmp.eq.s32.totalorder %s18, 1
      %p78 = scmp.ne.s32.totalorder %s73, %s75
      %p79 = scmp.eq.s32.totalorder %s18, 0
      %p80 = por %p78, %p79
      %p81 = scmp.ne.s32.totalorder %s73, %s75
      %p82 = scmp.eq.s32.totalorder %s23, 1
      %p83 = por %p81, %p82
      %p84 = scmp.ne.s32.totalorder %s75, %s76
      %p85 = scmp.eq.s32.totalorder %s23, 0
      %p86 = por %p84, %p85
      %p87 = scmp.ne.s32.totalorder %s75, %s76
      %p88 = scmp.eq.s32.totalorder %s24, 1
      %p89 = por %p87, %p88
      %p91 = scmp.ne.s32.totalorder %s76, %s90
      %p92 = scmp.eq.s32.totalorder %s24, 0
      %p93 = por %p91, %p92
      %s95 = sadd.s32 %s94, 1
      %p98 = scmp.eq.s32.totalorder %s18, 1
      %p99 = scmp.ne.s32.totalorder %s94, %s96
      %p100 = scmp.eq.s32.totalorder %s18, 0
      %p101 = por %p99, %p100
      %p102 = scmp.ne.s32.totalorder %s94, %s96
      %p103 = scmp.eq.s32.totalorder %s23, 1
      %p104 = por %p102, %p103
      %p105 = scmp.ne.s32.totalorder %s96, %s97
      %p106 = scmp.eq.s32.totalorder %s23, 0
      %p107 = por %p105, %p106
      %p108 = scmp.ne.s32.totalorder %s96, %s97
      %p109 = scmp.eq.s32.totalorder %s24, 1
      %p110 = por %p108, %p109
      %p112 = scmp.ne.s32.totalorder %s97, %s111
      %p113 = scmp.eq.s32.totalorder %s24, 0
      %p114 = por %p112, %p113
      %s116 = sadd.s32 %s115, 1
      %p119 = scmp.eq.s32.totalorder %s18, 1
      %p120 = scmp.ne.s32.totalorder %s115, %s117
      %p121 = scmp.eq.s32.totalorder %s18, 0
      %p122 = por %p120, %p121
      %p123 = scmp.ne.s32.totalorder %s115, %s117
      %p124 = scmp.eq.s32.totalorder %s23, 1
      %p125 = por %p123, %p124
      %p126 = scmp.ne.s32.totalorder %s117, %s118
      %p127 = scmp.eq.s32.totalorder %s23, 0
      %p128 = por %p126, %p127
      %p129 = scmp.ne.s32.totalorder %s117, %s118
      %p130 = scmp.eq.s32.totalorder %s24, 1
      %p131 = por %p129, %p130
      %p133 = scmp.ne.s32.totalorder %s118, %s132
      %p134 = scmp.eq.s32.totalorder %s24, 0
      %p135 = por %p133, %p134
      %s137 = sadd.s32 %s136, 1
      %p140 = scmp.eq.s32.totalorder %s18, 1
      %p141 = scmp.ne.s32.totalorder %s136, %s138
      %p142 = scmp.eq.s32.totalorder %s18, 0
      %p143 = por %p141, %p142
      %p144 = scmp.ne.s32.totalorder %s136, %s138
      %p145 = scmp.eq.s32.totalorder %s23, 1
      %p146 = por %p144, %p145
      %p147 = scmp.ne.s32.totalorder %s138, %s139
      %p148 = scmp.eq.s32.totalorder %s23, 0
      %p149 = por %p147, %p148
      %p150 = scmp.ne.s32.totalorder %s138, %s139
      %p151 = scmp.eq.s32.totalorder %s24, 1
      %p152 = por %p150, %p151
      %p154 = scmp.ne.s32.totalorder %s139, %s153
      %p155 = scmp.eq.s32.totalorder %s24, 0
      %p156 = por %p154, %p155
      %s158 = sadd.s32 %s157, 1
      %p161 = scmp.eq.s32.totalorder %s18, 1
      %p162 = scmp.ne.s32.totalorder %s157, %s159
      %p163 = scmp.eq.s32.totalorder %s18, 0
      %p164 = por %p162, %p163
      %p165 = scmp.ne.s32.totalorder %s157, %s159
      %p166 = scmp.eq.s32.totalorder %s23, 1
      %p167 = por %p165, %p166
      %p168 = scmp.ne.s32.totalorder %s159, %s160
      %p169 = scmp.eq.s32.totalorder %s23, 0
      %p170 = por %p168, %p169
      %p171 = scmp.ne.s32.totalorder %s159, %s160
      %p172 = scmp.eq.s32.totalorder %s24, 1
      %p173 = por %p171, %p172
      %p175 = scmp.ne.s32.totalorder %s160, %s174
      %p176 = scmp.eq.s32.totalorder %s24, 0
      %p177 = por %p175, %p176
      %s178 = ssub.s32 %s18, %s25
      %p179 = scmp.eq.s32.totalorder %s178, 0
      %s181 = sadd.s32 %s180, 1
      %s182 = scalar_select %p179, %s180, %s181
      %p185 = pneg %p179
      %p186 = scmp.eq.s32.totalorder %s18, 1
      %p187 = por %p185, %p186
      %p188 = scmp.ne.s32.totalorder %s180, %s183
      %p189 = scmp.eq.s32.totalorder %s18, 0
      %p190 = por %p188, %p189
      %p191 = scmp.ne.s32.totalorder %s180, %s183
      %p192 = scmp.eq.s32.totalorder %s23, 1
      %p193 = por %p191, %p192
      %p194 = scmp.ne.s32.totalorder %s183, %s184
      %p195 = scmp.eq.s32.totalorder %s23, 0
      %p196 = por %p194, %p195
      %p197 = scmp.ne.s32.totalorder %s183, %s184
      %p198 = scmp.eq.s32.totalorder %s24, 1
      %p199 = por %p197, %p198
      %p201 = scmp.ne.s32.totalorder %s184, %s200
      %p202 = scmp.eq.s32.totalorder %s24, 0
      %p203 = por %p201, %p202
      %p204 = scmp.le.s32.totalorder 1, %s18
      %p205 = scmp.lt.s32.totalorder %s18, 3
      %p206 = pnand %p204, %p205
      %p207 = pneg %p206
      // Predicated region
      $region9: #{tpu_custom_call.1} parent=5 // pred_check
        _
      $region10: #{tpu_custom_call.1} parent=5 // pred_check_branch
        %209 = sbr.rel (%p206) target = $region12
      $region11: #{tpu_custom_call.1} parent=5 // pred_region
        %s210 = ssub.s32 %s18, 1
        // Predicated region
        $region13: #{tpu_custom_call.1} parent=11 // pred_check
          %p211 = pneg %p65
        $region14: #{tpu_custom_call.1} parent=11 // pred_check_branch
          %213 = sbr.rel (%p211) target = $region16
        $region15: #{tpu_custom_call.1} parent=11 // pred_region
          _
        $region16: #{tpu_custom_call.1} parent=11 // pred_fallthru
          _
        // Predicated region
        $region17: #{tpu_custom_call.1} parent=11 // pred_check
          %p214 = pneg %p86
        $region18: #{tpu_custom_call.1} parent=11 // pred_check_branch
          %216 = sbr.rel (%p214) target = $region20
        $region19: #{tpu_custom_call.1} parent=11 // pred_region
          _
        $region20: #{tpu_custom_call.1} parent=11 // pred_fallthru
          _
        // Predicated region
        $region21: #{tpu_custom_call.1} parent=11 // pred_check
          %p217 = pneg %p107
        $region22: #{tpu_custom_call.1} parent=11 // pred_check_branch
          %219 = sbr.rel (%p217) target = $region24
        $region23: #{tpu_custom_call.1} parent=11 // pred_region
          _
        $region24: #{tpu_custom_call.1} parent=11 // pred_fallthru
          _
        // Predicated region
        $region25: #{tpu_custom_call.1} parent=11 // pred_check
          %p220 = pneg %p128
        $region26: #{tpu_custom_call.1} parent=11 // pred_check_branch
          %222 = sbr.rel (%p220) target = $region28
        $region27: #{tpu_custom_call.1} parent=11 // pred_region
          _
        $region28: #{tpu_custom_call.1} parent=11 // pred_fallthru
          _
        // Predicated region
        $region29: #{tpu_custom_call.1} parent=11 // pred_check
          %p223 = pneg %p149
        $region30: #{tpu_custom_call.1} parent=11 // pred_check_branch
          %225 = sbr.rel (%p223) target = $region32
        $region31: #{tpu_custom_call.1} parent=11 // pred_region
          _
        $region32: #{tpu_custom_call.1} parent=11 // pred_fallthru
          _
        // Predicated region
        $region33: #{tpu_custom_call.1} parent=11 // pred_check
          %p226 = pneg %p170
        $region34: #{tpu_custom_call.1} parent=11 // pred_check_branch
          %228 = sbr.rel (%p226) target = $region36
        $region35: #{tpu_custom_call.1} parent=11 // pred_region
          _
        $region36: #{tpu_custom_call.1} parent=11 // pred_fallthru
          _
      $region12: #{tpu_custom_call.1} parent=5 // pred_fallthru
        _
      %p229 = scmp.lt.s32.totalorder %s18, 2
      // Predicated region
      $region37: #{tpu_custom_call.1} parent=5 // pred_check
        %p230 = pneg %p229
      $region38: #{tpu_custom_call.1} parent=5 // pred_check_branch
        %232 = sbr.rel (%p230) target = $region40
      $region39: #{tpu_custom_call.1} parent=5 // pred_region
        // Predicated region
        $region41: #{tpu_custom_call.1} parent=39 // pred_check
          %p233 = pneg %p38
        $region42: #{tpu_custom_call.1} parent=39 // pred_check_branch
          %235 = sbr.rel (%p233) target = $region44
        $region43: #{tpu_custom_call.1} parent=39 // pred_region
          %s236 = smul.u32 16, %s18
          %s237 = ssub.s32 25, %s236
          %p238 = scmp.lt.s32.totalorder %s237, 16
          %s239 = scalar_select %p238, %s237, 16
          %s240 = smul.u32 128, %s239
          %p241 = scmp.lt.s32.totalorder %s236, 24
          %s242 = scalar_select %p241, %s236, 24
          %s243 = smul.addr %s242, 8
          %s244 = scalar_lea.vmem %s0, %s243
          %s245 = smul.u32 16, %s18
          %s246 = ssub.s32 25, %s245
          %p247 = scmp.lt.s32.totalorder %s246, 16
          %s248 = scalar_select %p247, %s246, 16
          %s249 = smul.u32 128, %s248
        $region44: #{tpu_custom_call.1} parent=39 // pred_fallthru
          _
      $region40: #{tpu_custom_call.1} parent=5 // pred_fallthru
        _
      %p250 = scmp.le.s32.totalorder 1, %s18
      %p251 = scmp.lt.s32.totalorder %s18, 3
      %p252 = pnand %p250, %p251
      %p253 = pneg %p252
      // Predicated region
      $region45: #{tpu_custom_call.1} parent=5 // pred_check
        _
      $region46: #{tpu_custom_call.1} parent=5 // pred_check_branch
        %255 = sbr.rel (%p252) target = $region48
      $region47: #{tpu_custom_call.1} parent=5 // pred_region
        %s256 = ssub.s32 %s18, 1
        %s257 = smul.u32 16, %s23
        %s258 = ssub.s32 25, %s257
        %p259 = scmp.lt.s32.totalorder %s258, 16
        %s260 = scalar_select %p259, %s258, 16
        %s261 = smul.u32 128, %s260
        %p262 = scmp.lt.s32.totalorder %s257, 24
        %s263 = scalar_select %p262, %s257, 24
        %s264 = smul.addr %s263, 8
        %s265 = scalar_lea.vmem %s0, %s264
        %p266 = pneg %p44
        %p267 = pneg %p41
        %p268 = pneg %p65
        %p269 = pneg %p62
        %p270 = pneg %p86
        %p271 = pneg %p83
        %p272 = pneg %p107
        %p273 = pneg %p104
        %p274 = pneg %p128
        %p275 = pneg %p125
        %p276 = pneg %p149
        %p277 = pneg %p146
        %p278 = pneg %p170
        %p279 = pneg %p167
        %p280 = pneg %p196
        %p281 = pneg %p193
        %s282 = sand.u32 %s183, 1
        %s283 = scalar_lea.sflag [#allocation4], %s282
        %s284 = sand.u32 %s183, 1
        %s285 = scalar_lea.vmem [#allocation3], %s284
        %s286 = smul.u32 16, %s23
        %s287 = ssub.s32 25, %s286
        %p288 = scmp.lt.s32.totalorder %s287, 16
        %s289 = scalar_select %p288, %s287, 16
        %s290 = smul.u32 128, %s289
        %p291 = scmp.lt.s32.totalorder %s286, 24
        %s292 = scalar_select %p291, %s286, 24
        %s293 = smul.addr %s292, 8
        %s294 = scalar_lea.vmem %s0, %s293
        %s295 = smul.u32 16, %s23
        %s296 = ssub.s32 25, %s295
        %p297 = scmp.lt.s32.totalorder %s296, 16
        %s298 = scalar_select %p297, %s296, 16
        %s299 = smul.u32 128, %s298
        %v301 = vld [vmem:[%s294] sm:$0xff]
        %v302 = vld [vmem:[%s294 + $0x8] sm:$0xff]
        %v303 = vld [vmem:[%s294 + $0x10] sm:$0xff]
        %v304 = vld [vmem:[%s294 + $0x18] sm:$0xff]
        %v305 = vld [vmem:[%s294 + $0x20] sm:$0xff]
        %v306 = vld [vmem:[%s294 + $0x28] sm:$0xff]
        %v307 = vld [vmem:[%s294 + $0x30] sm:$0xff]
        %v308 = vld [vmem:[%s294 + $0x38] sm:$0xff]
        %v309 = vld [vmem:[%s294 + $0x40] sm:$0xff]
        %v310 = vld [vmem:[%s294 + $0x48] sm:$0xff]
        %v311 = vld [vmem:[%s294 + $0x50] sm:$0xff]
        %v312 = vld [vmem:[%s294 + $0x58] sm:$0xff]
        %v313 = vld [vmem:[%s294 + $0x60] sm:$0xff]
        %v314 = vld [vmem:[%s294 + $0x68] sm:$0xff]
        %v315 = vld [vmem:[%s294 + $0x70] sm:$0xff]
        %v316 = vld [vmem:[%s294 + $0x78] sm:$0xff]
        %v317 = vpack.c.bf16 %v302, %v301
        %v318 = vpack.c.bf16 %v304, %v303
        %v319 = vpack.c.bf16 %v306, %v305
        %v320 = vpack.c.bf16 %v308, %v307
        %v321 = vpack.c.bf16 %v310, %v309
        %v322 = vpack.c.bf16 %v312, %v311
        %v323 = vpack.c.bf16 %v314, %v313
        %v324 = vpack.c.bf16 %v316, %v315
        %v325 = vld [vmem:[%s1] sm:$0xf]
        %v326 = vld [vmem:[%s1 + $0x4] sm:$0xf]
        %v327 = vld [vmem:[%s2] sm:$0xff]
        %v328 = vld [vmem:[%s2 + $0x8] sm:$0xff]
        %330 = vset.pattern.permute.xlu0 0
        %331 = vperm.xlu0 %330, %v327
        %v332 = vpop.permute.xlu0 %331
        %335 = vset.pattern.permute.xlu0 0
        %336 = vperm.xlu0 %335, %v328
        %v337 = vpop.permute.xlu0 %336
        %v341 = vunpack.c.l.b16 %v325
        %v342 = vunpack.c.l.b16 %v326
        %v343 = vpack.c.b16 %v342, %v341
        %vm344 = vcmask 261120
        %v346 = vsel %vm344, %v343, 0
        %v349 = vsel %vm344, %v317, 0
        %v352 = vsel %vm344, %v318, 0
        %v355 = vsel %vm344, %v319, 0
        %v358 = vsel %vm344, %v320, 0
        %v361 = vsel %vm344, %v321, 0
        %v364 = vsel %vm344, %v322, 0
        %v367 = vsel %vm344, %v323, 0
        %v370 = vsel %vm344, %v324, 0
        %372 = vmatprep.subr.bf16.mxu0 0
        %373 = vmatpush1.bf16.xpose.msra.mxu0 %v370
        %374 = vmatprep.subr.bf16.mxu0 0
        %375 = vmatpush1.bf16.xpose.msra.mxu0 %v367
        %376 = vmatprep.subr.bf16.mxu0 0
        %377 = vmatpush1.bf16.xpose.msra.mxu0 %v364
        %378 = vmatprep.subr.bf16.mxu0 0
        %379 = vmatpush1.bf16.xpose.msra.mxu0 %v361
        %380 = vmatprep.subr.bf16.mxu0 0
        %381 = vmatpush1.bf16.xpose.msra.mxu0 %v358
        %382 = vmatprep.subr.bf16.mxu0 0
        %383 = vmatpush1.bf16.xpose.msra.mxu0 %v355
        %384 = vmatprep.subr.bf16.mxu0 0
        %385 = vmatpush1.bf16.xpose.msra.mxu0 %v352
        %386 = vmatprep.subr.bf16.mxu0 0
        %387 = vmatpush1.bf16.xpose.msra.mxu0 %v349
        %388 = vmatprep.subr.bf16.mxu0 0
        %389 = vmatpush2.bf16.xpose.msra.mxu0 0
        %390 = vmatprep.subr.bf16.mxu0 0
        %391 = vmatpush2.bf16.xpose.msra.mxu0 0
        %392 = vmatprep.subr.bf16.mxu0 0
        %393 = vmatpush2.bf16.xpose.msra.mxu0 0
        %394 = vmatprep.subr.bf16.mxu0 0
        %395 = vmatpush2.bf16.xpose.msra.mxu0 0
        %396 = vmatprep.subr.bf16.mxu0 0
        %397 = vmatpush2.bf16.xpose.msra.mxu0 0
        %398 = vmatprep.subr.bf16.mxu0 0
        %399 = vmatpush2.bf16.xpose.msra.mxu0 0
        %400 = vmatprep.subr.bf16.mxu0 0
        %401 = vmatpush2.bf16.xpose.msra.mxu0 0
        %402 = vmatprep.subr.bf16.mxu0 0
        %403 = vmatpush2.bf16.xpose.msra.mxu0 0
        %404 = vmatprep.mubr.bf16.mxu0 0
        %405 = vmatmul.mubr.bf16.gmra.mxu0 %v346
        %v406 = vpop.f32.mrf.mxu0
        %v407 = vadd.f32 %v332, %v406
        %v408 = vpop.f32.mrf.mxu0
        %v409 = vpop.f32.mrf.mxu0
        %v410 = vadd.f32 %v337, %v409
        %v411 = vpop.f32.mrf.mxu0
        %412 = vdwg.mxu0
        %v413 = vmax.f32 %v407, 0.0
        %v414 = vmax.f32 %v410, 0.0
        %v415 = vld [vmem:[%s3] sm:$0xf]
        %v416 = vpack.c.bf16 %v414, %v413
        %v417 = vld [vmem:[%s4] sm:$0xff]
        %419 = vset.pattern.permute.xlu0 0
        %420 = vperm.xlu0 %419, %v417
        %v421 = vpop.permute.xlu0 %420
        %vm423 = vcmask 130048
        %v425 = vsel %vm423, %v415, 0
        %427 = vmatprep.subr.bf16.mxu0 0
        %428 = vmatpush1.bf16.msra.mxu0 0
        %429 = vmatprep.subr.bf16.mxu0 0
        %430 = vmatpush1.bf16.msra.mxu0 0
        %431 = vmatprep.subr.bf16.mxu0 0
        %432 = vmatpush1.bf16.msra.mxu0 0
        %433 = vmatprep.subr.bf16.mxu0 0
        %434 = vmatpush1.bf16.msra.mxu0 0
        %435 = vmatprep.subr.bf16.mxu0 0
        %436 = vmatpush1.bf16.msra.mxu0 0
        %437 = vmatprep.subr.bf16.mxu0 0
        %438 = vmatpush1.bf16.msra.mxu0 0
        %439 = vmatprep.subr.bf16.mxu0 0
        %440 = vmatpush1.bf16.msra.mxu0 0
        %441 = vmatprep.subr.bf16.mxu0 0
        %442 = vmatpush1.bf16.msra.mxu0 %v416
        %443 = vmatprep.subr.bf16.mxu0 0
        %444 = vmatpush2.bf16.msra.mxu0 0
        %445 = vmatprep.subr.bf16.mxu0 0
        %446 = vmatpush2.bf16.msra.mxu0 0
        %447 = vmatprep.subr.bf16.mxu0 0
        %448 = vmatpush2.bf16.msra.mxu0 0
        %449 = vmatprep.subr.bf16.mxu0 0
        %450 = vmatpush2.bf16.msra.mxu0 0
        %451 = vmatprep.subr.bf16.mxu0 0
        %452 = vmatpush2.bf16.msra.mxu0 0
        %453 = vmatprep.subr.bf16.mxu0 0
        %454 = vmatpush2.bf16.msra.mxu0 0
        %455 = vmatprep.subr.bf16.mxu0 0
        %456 = vmatpush2.bf16.msra.mxu0 0
        %457 = vmatprep.subr.bf16.mxu0 0
        %458 = vmatpush2.bf16.msra.mxu0 0
        %459 = vmatprep.mubr.bf16.mxu0 0
        %460 = vmatmul.mubr.bf16.gmra.mxu0 %v425
        %v461 = vpop.f32.mrf.mxu0
        %v462 = vadd.f32 %v421, %v461
        %v463 = vpop.f32.mrf.mxu0
        %v464 = vpop.f32.mrf.mxu0
        %v465 = vpop.f32.mrf.mxu0
        %466 = vdwg.mxu0
        %v467 = vmax.f32 %v462, 0.0
        %v468 = vld [vmem:[%s5] sm:$0x1]
        %v469 = vpack.c.bf16 %v467, %v467
        %v470 = vld [vmem:[#allocation2] sm:$0x1]
        %472 = vset.pattern.permute.xlu0 0
        %473 = vperm.xlu0 %472, %v470
        %v474 = vpop.permute.xlu0 %473
        %v476 = vlaneseq
        %v477 = vshrl.u32 %v476, 7
        %v478 = vsub.s32 0, %v477
        %v479 = vrot.slane %v474, %v478
        %vm480 = vcmask 64512
        %v482 = vsel %vm480, %v468, 0
        %vm484 = vcmask 1043456
        %v486 = vsel %vm484, %v469, 0
        %488 = vmatprep.subr.bf16.mxu0 0
        %489 = vmatpush1.bf16.msra.mxu0 0
        %490 = vmatprep.subr.bf16.mxu0 0
        %491 = vmatpush1.bf16.msra.mxu0 0
        %492 = vmatprep.subr.bf16.mxu0 0
        %493 = vmatpush1.bf16.msra.mxu0 0
        %494 = vmatprep.subr.bf16.mxu0 0
        %495 = vmatpush1.bf16.msra.mxu0 0
        %496 = vmatprep.subr.bf16.mxu0 0
        %497 = vmatpush1.bf16.msra.mxu0 0
        %498 = vmatprep.subr.bf16.mxu0 0
        %499 = vmatpush1.bf16.msra.mxu0 0
        %500 = vmatprep.subr.bf16.mxu0 0
        %501 = vmatpush1.bf16.msra.mxu0 0
        %502 = vmatprep.subr.bf16.mxu0 0
        %503 = vmatpush1.bf16.msra.mxu0 %v486
        %504 = vmatprep.subr.bf16.mxu0 0
        %505 = vmatpush2.bf16.msra.mxu0 0
        %506 = vmatprep.subr.bf16.mxu0 0
        %507 = vmatpush2.bf16.msra.mxu0 0
        %508 = vmatprep.subr.bf16.mxu0 0
        %509 = vmatpush2.bf16.msra.mxu0 0
        %510 = vmatprep.subr.bf16.mxu0 0
        %511 = vmatpush2.bf16.msra.mxu0 0
        %512 = vmatprep.subr.bf16.mxu0 0
        %513 = vmatpush2.bf16.msra.mxu0 0
        %514 = vmatprep.subr.bf16.mxu0 0
        %515 = vmatpush2.bf16.msra.mxu0 0
        %516 = vmatprep.subr.bf16.mxu0 0
        %517 = vmatpush2.bf16.msra.mxu0 0
        %518 = vmatprep.subr.bf16.mxu0 0
        %519 = vmatpush2.bf16.msra.mxu0 0
        %520 = vmatprep.mubr.bf16.mxu0 0
        %521 = vmatmul.mubr.bf16.gmra.mxu0 %v482
        %v522 = vpop.f32.mrf.mxu0
        %v523 = vadd.f32 %v479, %v522
        %v524 = vpop.f32.mrf.mxu0
        %v525 = vpop.f32.mrf.mxu0
        %v526 = vpop.f32.mrf.mxu0
        %527 = vdwg.mxu0
        %v528 = vxor.u32 %v523, 2147483648
        %v529 = vmul.f32 %v528, 1.442695
        %v530 = vpow.pop %v529
        %v531 = vadd.f32 %v530, 1.0
        %v532 = vrcp.pop %v531
        %v533 = vmul.f32 1.0, %v532
        %534 = vst [vmem:[%s285] sm:$0x1] %v533
        %s535 = sand.u32 %s183, 1
        %s536 = scalar_lea.sflag [#allocation4], %s535
        %s537 = sand.u32 %s183, 1
        %s538 = scalar_lea.vmem [#allocation3], %s537
        // Predicated region
        $region49: #{tpu_custom_call.1} parent=47 // pred_check
          %p539 = pneg %p193
        $region50: #{tpu_custom_call.1} parent=47 // pred_check_branch
          %541 = sbr.rel (%p539) target = $region52
        $region51: #{tpu_custom_call.1} parent=47 // pred_region
          %s543 = ssub.s32 16, 16
          %544 = vsyncadd %s536, %s543
          %s545 = smul.addr %s23, 16
          %s546 = scalar_lea.hbm %s7, %s545
          %s548 = sshll.u32 %s538, 4
          %s549 = int_to_ptr.vmem [resolvable:$true] %s548
          %551 = dma.vmem_to_hbm [thread:$0]  %s549, 16, %s546, %s536
        $region52: #{tpu_custom_call.1} parent=47 // pred_fallthru
          _
      $region48: #{tpu_custom_call.1} parent=5 // pred_fallthru
        _
      %p552 = scmp.le.s32.totalorder 2, %s18
      // Predicated region
      $region53: #{tpu_custom_call.1} parent=5 // pred_check
        %p553 = pneg %p552
      $region54: #{tpu_custom_call.1} parent=5 // pred_check_branch
        %555 = sbr.rel (%p553) target = $region56
      $region55: #{tpu_custom_call.1} parent=5 // pred_region
        %s556 = ssub.s32 %s18, 2
        // Predicated region
        $region57: #{tpu_custom_call.1} parent=55 // pred_check
          %p557 = pneg %p199
        $region58: #{tpu_custom_call.1} parent=55 // pred_check_branch
          %559 = sbr.rel (%p557) target = $region60
        $region59: #{tpu_custom_call.1} parent=55 // pred_region
          %s560 = sand.u32 %s184, 1
          %s561 = scalar_lea.sflag [#allocation4], %s560
          %s562 = sand.u32 %s184, 1
          %s563 = scalar_lea.vmem [#allocation3], %s562
          %564 = dma.done %s561, 16
        $region60: #{tpu_custom_call.1} parent=55 // pred_fallthru
          _
      $region56: #{tpu_custom_call.1} parent=5 // pred_fallthru
        _
    $region6: #{tpu_custom_call.1} parent=1 // loop_footer
      %s22 = sadd.s32 1, %s18
    $region7: #{tpu_custom_call.1} parent=1 // loop_footer_branch
      %17 = sbr.rel target = $region3
    $region8: #{tpu_custom_call.1} parent=1 // loop_exit
      _
    %565 = vsyncpa [#allocation4], 1
    %s566 = scalar_lea.sflag [#allocation4], 1
    %567 = vsyncpa %s566, 1

</llo_original>
